<compile_context>
chip_gen: v6e
topology: v6e:2x2x1
jax: 0.10.0
libtpu: 0.0.40
codegen_flags: <defaults>
</compile_context>

<pallas_src>
import jax
import jax.numpy as jnp
import numpy as np
from jax.experimental import pallas as pl
from jax.experimental.pallas import tpu as pltpu

EPS = 1e-5


def _round_up(x, m):
    return ((x + m - 1) // m) * m


def _layer_norm_f32(v, w, b, inv_d):
    """Two-pass LayerNorm in f32 (mean, then centered variance)."""
    mu = jnp.sum(v, axis=-1, keepdims=True) * inv_d
    c = v - mu
    var = jnp.sum(c * c, axis=-1, keepdims=True) * inv_d
    return c * jax.lax.rsqrt(var + EPS) * w + b


# --------------------------------------------------------------------------------------
# Kernel 1: fully-resident weights (v5e/v6e, and v7x at moderate FFN widths).
# --------------------------------------------------------------------------------------
def _norm_layer_kernel_resident(x_ref, res_ref, ln_w_ref, ln_b_ref,
                                w1_ref, b1_ref, w2_ref, b2_ref, o_ref):
    inv_d = 1.0 / x_ref.shape[-1]
    ln_w = ln_w_ref[...].astype(jnp.float32)   # (1, D), broadcast over rows
    ln_b = ln_b_ref[...].astype(jnp.float32)

    # residual add + LayerNorm #1 (f32 statistics)
    x = x_ref[...].astype(jnp.float32) + res_ref[...].astype(jnp.float32)
    xn = _layer_norm_f32(x, ln_w, ln_b, inv_d)

    # fc1 + bias + ReLU; fused downcast so only the bf16 hidden copy stays live.
    h = jnp.dot(xn.astype(w1_ref.dtype), w1_ref[...],
                preferred_element_type=jnp.float32)
    h = jnp.maximum(h + b1_ref[...].astype(jnp.float32), 0.0).astype(w2_ref.dtype)

    # fc2 + bias + residual + LayerNorm #2 (same params)
    y = jnp.dot(h, w2_ref[...], preferred_element_type=jnp.float32)
    y = y + b2_ref[...].astype(jnp.float32) + xn
    o_ref[...] = _layer_norm_f32(y, ln_w, ln_b, inv_d).astype(o_ref.dtype)


# --------------------------------------------------------------------------------------
# Kernel 2: FFN-dimension streamed (v7x at large F where resident weights blow 64 MiB).
# Grid = (row tiles, F tiles); the F axis is "arbitrary" and accumulates into scratch.
# --------------------------------------------------------------------------------------
def _norm_layer_kernel_streamed(x_ref, res_ref, ln_w_ref, ln_b_ref,
                                w1_ref, b1_ref, w2_ref, b2_ref, o_ref,
                                xn_ref, acc_ref):
    kf = pl.program_id(1)
    inv_d = 1.0 / x_ref.shape[-1]
    ln_w = ln_w_ref[...].astype(jnp.float32)
    ln_b = ln_b_ref[...].astype(jnp.float32)

    @pl.when(kf == 0)
    def _():
        x = x_ref[...].astype(jnp.float32) + res_ref[...].astype(jnp.float32)
        xn_ref[...] = _layer_norm_f32(x, ln_w, ln_b, inv_d)
        acc_ref[...] = jnp.zeros_like(acc_ref)

    # fc1 tile + bias + ReLU + downcast, then accumulate the fc2 partial product.
    h = jnp.dot(xn_ref[...].astype(w1_ref.dtype), w1_ref[...],
                preferred_element_type=jnp.float32)
    h = jnp.maximum(h + b1_ref[...].astype(jnp.float32), 0.0).astype(w2_ref.dtype)
    acc_ref[...] += jnp.dot(h, w2_ref[...], preferred_element_type=jnp.float32)

    @pl.when(kf == pl.num_programs(1) - 1)
    def _():
        y = acc_ref[...] + b2_ref[...].astype(jnp.float32) + xn_ref[...]
        o_ref[...] = _layer_norm_f32(y, ln_w, ln_b, inv_d).astype(o_ref.dtype)


# --------------------------------------------------------------------------------------
# Wrapper
# --------------------------------------------------------------------------------------
def _vmem_limit_bytes_default():
    """Per-chip scoped-VMEM budget: capacity minus ~12 MiB headroom, capped at 112 MiB."""
    try:
        cap = pltpu.get_tpu_info().vmem_capacity_bytes
        return int(min(cap - 12 * 1024 * 1024, 112 * 1024 * 1024))
    except Exception:
        # Conservative fallback that is safe on v5e/v6e/v7x and above the scoped defaults.
        return 48 * 1024 * 1024


def _spec(shape, index_map, *, single_buffer=False):
    """BlockSpec; constant-index operands are single-buffered (no useless double-buffer)."""
    if single_buffer:
        try:
            return pl.BlockSpec(shape, index_map, pipeline_mode=pl.Buffered(1))
        except (TypeError, AttributeError):   # older jax without pipeline_mode/Buffered
            return pl.BlockSpec(shape, index_map)
    return pl.BlockSpec(shape, index_map)


def norm_layer_forward(x, residual, ln_w, ln_b, w1, b1, w2, b2, *,
                       block_m=256, block_f=2048,
                       compute_dtype=jnp.bfloat16,
                       vmem_limit_bytes=None,
                       force_stream=None):
    """x, residual: (seq, batch, embed). w1: (D, F), w2: (F, D). Returns (seq, batch, embed)."""
    S, B, D = x.shape
    F = w1.shape[1]
    M = S * B

    if vmem_limit_bytes is None:
        vmem_limit_bytes = _vmem_limit_bytes_default()

    # bf16 MXU path (fp8 is also possible on v7x): cast weights once in the wrapper.
    w1c = w1.astype(compute_dtype)
    w2c = w2.astype(compute_dtype)
    itemsize = np.dtype(compute_dtype).itemsize

    # Row tile: block_m (256 fills the 256-wide MXU on v6e/v7x and is 128-aligned for
    # v5e; sweep 512 on v5e/v6e if desired), clamped to the 8-aligned problem size for
    # tiny inputs, then halved when the whole problem would be a single grid step so the
    # "parallel" row axis can shard across both v7x TensorCores.
    TM = min(block_m, _round_up(M, 8))
    if TM == _round_up(M, 8) and M >= 16:
        TM = _round_up((TM + 1) // 2, 8)
    M_pad = _round_up(M, TM)

    x2 = x.reshape(M, D)
    r2 = residual.reshape(M, D)
    padded = M_pad != M
    if padded:   # only pay the extra HBM round trip when the tile doesn't divide M
        x2 = jnp.pad(x2, ((0, M_pad - M), (0, 0)))
        r2 = jnp.pad(r2, ((0, M_pad - M), (0, 0)))
    io_aliases = {0: 0} if padded else {}   # only donate a fresh padded copy

    # Keep both weights resident unless they would eat a large chunk of scoped VMEM
    # (v7x at big FFN widths); then stream the FFN dimension instead.
    weight_bytes = 2 * D * F * itemsize
    stream = (weight_bytes > vmem_limit_bytes // 3) if force_stream is None else force_stream

    cparams = pltpu.CompilerParams(
        dimension_semantics=("parallel",) if not stream else ("parallel", "arbitrary"),
        vmem_limit_bytes=vmem_limit_bytes,
    )

    if not stream:
        row_spec = pl.BlockSpec((TM, D), lambda i: (i, 0))
        const = lambda i: (0, 0)
        out = pl.pallas_call(
            _norm_layer_kernel_resident,
            out_shape=jax.ShapeDtypeStruct((M_pad, D), x.dtype),
            grid=(M_pad // TM,),
            in_specs=[
                row_spec,                                       # x tile
                row_spec,                                       # residual tile
                _spec((1, D), const, single_buffer=True),       # ln weight
                _spec((1, D), const, single_buffer=True),       # ln bias
                _spec((D, F), const, single_buffer=True),       # w1 (resident)
                _spec((1, F), const, single_buffer=True),       # b1
                _spec((F, D), const, single_buffer=True),       # w2 (resident)
                _spec((1, D), const, single_buffer=True),       # b2
            ],
            out_specs=row_spec,
            input_output_aliases=io_aliases,
            compiler_params=cparams,
        )(x2, r2,
          ln_w.reshape(1, D), ln_b.reshape(1, D),
          w1c, b1.reshape(1, F),
          w2c, b2.reshape(1, D))
    else:
        # FFN-streamed path: block the F dimension (lane-aligned tiles).
        TF = min(block_f, F)
        if TF < F:
            TF = max(128, (TF // 128) * 128)
        F_pad = _round_up(F, TF)
        if F_pad != F:
            # Zero-padding F is exact: padded hidden units are relu(0 + 0) = 0 and the
            # padded w2 rows contribute nothing.
            w1c = jnp.pad(w1c, ((0, 0), (0, F_pad - F)))
            w2c = jnp.pad(w2c, ((0, F_pad - F), (0, 0)))
            b1p = jnp.pad(b1, ((0, F_pad - F),))
        else:
            b1p = b1

        row_spec = pl.BlockSpec((TM, D), lambda i, kf: (i, 0))
        const2 = lambda i, kf: (0, 0)
        out = pl.pallas_call(
            _norm_layer_kernel_streamed,
            out_shape=jax.ShapeDtypeStruct((M_pad, D), x.dtype),
            grid=(M_pad // TM, F_pad // TF),
            in_specs=[
                row_spec,                                        # x tile (resident over kf)
                row_spec,                                        # residual tile
                _spec((1, D), const2, single_buffer=True),       # ln weight
                _spec((1, D), const2, single_buffer=True),       # ln bias
                pl.BlockSpec((D, TF), lambda i, kf: (0, kf)),    # w1 F-tile (streamed)
                pl.BlockSpec((1, TF), lambda i, kf: (0, kf)),    # b1 F-tile
                pl.BlockSpec((TF, D), lambda i, kf: (kf, 0)),    # w2 F-tile (streamed)
                _spec((1, D), const2, single_buffer=True),       # b2
            ],
            out_specs=row_spec,
            scratch_shapes=[
                pltpu.VMEM((TM, D), jnp.float32),                # LN#1 output (residual 2)
                pltpu.VMEM((TM, D), jnp.float32),                # fc2 accumulator
            ],
            input_output_aliases=io_aliases,
            compiler_params=cparams,
        )(x2, r2,
          ln_w.reshape(1, D), ln_b.reshape(1, D),
          w1c, b1p.reshape(1, F_pad),
          w2c, b2.reshape(1, D))

    if padded:
        out = out[:M]
    return out.reshape(S, B, D)


# --------------------------------------------------------------------------------------
# Pure-JAX reference (mirrors the kernel's compute-dtype matmul feed, f32 LN/accum).
# --------------------------------------------------------------------------------------
def _reference(x, residual, ln_w, ln_b, w1, b1, w2, b2, *, compute_dtype=jnp.float32):
    def ln(v):
        mu = jnp.mean(v, axis=-1, keepdims=True)
        var = jnp.mean((v - mu) * (v - mu), axis=-1, keepdims=True)
        return (v - mu) * jax.lax.rsqrt(var + EPS) * ln_w + ln_b

    x = x.astype(jnp.float32) + residual.astype(jnp.float32)
    x = ln(x)
    r = x
    h = jnp.dot(x.astype(compute_dtype), w1.astype(compute_dtype),
                preferred_element_type=jnp.float32) + b1
    h = jnp.maximum(h, 0.0)
    y = jnp.dot(h.astype(compute_dtype), w2.astype(compute_dtype),
                preferred_element_type=jnp.float32) + b2
    return ln(r + y)


if __name__ == "__main__":
    # Small, deterministic synthetic config:
    #   encoder_embed_dim=32, encoder_ffn_embed_dim=256, seq=8, batch=2
    S, B, D, F = 8, 2, 32, 256
    key = jax.random.PRNGKey(0)
    kx, kr, kw1, kw2 = jax.random.split(key, 4)

    x = jax.random.normal(kx, (S, B, D), dtype=jnp.float32)
    residual = jax.random.normal(kr, (S, B, D), dtype=jnp.float32)

    # LayerNorm params (PyTorch default init: weight=1, bias=0)
    ln_w = jnp.ones((D,), jnp.float32)
    ln_b = jnp.zeros((D,), jnp.float32)

    # fc1 / fc2: xavier_uniform weights (symmetric in fan_in/fan_out), zero bias.
    # Stored directly as (in, out) so the kernel does x @ W.
    bound1 = (6.0 / (D + F)) ** 0.5
    bound2 = (6.0 / (F + D)) ** 0.5
    w1 = jax.random.uniform(kw1, (D, F), jnp.float32, -bound1, bound1)
    b1 = jnp.zeros((F,), jnp.float32)
    w2 = jax.random.uniform(kw2, (F, D), jnp.float32, -bound2, bound2)
    b2 = jnp.zeros((D,), jnp.float32)

    # Reference mirrors the kernel's bf16 MXU feed (f32 LN and accumulation).
    ref = _reference(x, residual, ln_w, ln_b, w1, b1, w2, b2,
                     compute_dtype=jnp.bfloat16)

    # Path 1: fully-resident weights (v5e/v6e and small-F v7x).
    out_res = norm_layer_forward(x, residual, ln_w, ln_b, w1, b1, w2, b2,
                                 force_stream=False)
    out_res = jax.block_until_ready(out_res)
    assert out_res.shape == (S, B, D)
    assert jnp.allclose(out_res, ref, atol=2e-3, rtol=2e-3), "resident path mismatch"

    # Path 2: FFN-streamed accumulator (large-F / v7x path), exercised at small scale.
    out_str = norm_layer_forward(x, residual, ln_w, ln_b, w1, b1, w2, b2,
                                 force_stream=True, block_f=128)
    out_str = jax.block_until_ready(out_str)
    assert out_str.shape == (S, B, D)
    assert jnp.allclose(out_str, ref, atol=2e-3, rtol=2e-3), "streamed path mismatch"

    print("KERNEL_OK")
</pallas_src>

<mosaic_0001>
module attributes {stable_mosaic.version = 11 : i64} {
  func.func @_norm_layer_kernel_resident(%arg0: i32, %arg1: memref<8x32xf32, #tpu.memory_space<vmem>>, %arg2: memref<8x32xf32, #tpu.memory_space<vmem>>, %arg3: memref<1x32xf32, #tpu.memory_space<vmem>>, %arg4: memref<1x32xf32, #tpu.memory_space<vmem>>, %arg5: memref<32x256xbf16, #tpu.memory_space<vmem>>, %arg6: memref<1x256xf32, #tpu.memory_space<vmem>>, %arg7: memref<256x32xbf16, #tpu.memory_space<vmem>>, %arg8: memref<1x32xf32, #tpu.memory_space<vmem>>, %arg9: memref<8x32xf32, #tpu.memory_space<vmem>>) attributes {dimension_semantics = [#tpu.dimension_semantics<parallel>], iteration_bounds = array<i64: 2>, scalar_prefetch = 0 : i64, scratch_operands = 0 : i64, tpu.core_type = #tpu.core_type<tc>, window_params = [{transform_indices = @transform_0, window_bounds = array<i64: 8, 32>}, {transform_indices = @transform_1, window_bounds = array<i64: 8, 32>}, {pipeline_mode = #tpu.pipeline_mode<synchronous>, transform_indices = @transform_2, window_bounds = array<i64: 1, 32>}, {pipeline_mode = #tpu.pipeline_mode<synchronous>, transform_indices = @transform_3, window_bounds = array<i64: 1, 32>}, {pipeline_mode = #tpu.pipeline_mode<synchronous>, transform_indices = @transform_4, window_bounds = array<i64: 32, 256>}, {pipeline_mode = #tpu.pipeline_mode<synchronous>, transform_indices = @transform_5, window_bounds = array<i64: 1, 256>}, {pipeline_mode = #tpu.pipeline_mode<synchronous>, transform_indices = @transform_6, window_bounds = array<i64: 256, 32>}, {pipeline_mode = #tpu.pipeline_mode<synchronous>, transform_indices = @transform_7, window_bounds = array<i64: 1, 32>}, {transform_indices = @transform_8, window_bounds = array<i64: 8, 32>}]} {
    %c0 = arith.constant 0 : index
    %c0_0 = arith.constant 0 : index
    %0 = vector.load %arg3[%c0, %c0_0] : memref<1x32xf32, #tpu.memory_space<vmem>>, vector<1x32xf32>
    %c0_1 = arith.constant 0 : index
    %c0_2 = arith.constant 0 : index
    %1 = vector.load %arg4[%c0_1, %c0_2] : memref<1x32xf32, #tpu.memory_space<vmem>>, vector<1x32xf32>
    %c0_3 = arith.constant 0 : index
    %c0_4 = arith.constant 0 : index
    %2 = vector.load %arg1[%c0_3, %c0_4] : memref<8x32xf32, #tpu.memory_space<vmem>>, vector<8x32xf32>
    %c0_5 = arith.constant 0 : index
    %c0_6 = arith.constant 0 : index
    %3 = vector.load %arg2[%c0_5, %c0_6] : memref<8x32xf32, #tpu.memory_space<vmem>>, vector<8x32xf32>
    %4 = arith.addf %2, %3 : vector<8x32xf32>
    %cst = arith.constant dense<0.000000e+00> : vector<8xf32>
    %5 = vector.multi_reduction <add>, %4, %cst [1] : vector<8x32xf32> to vector<8xf32>
    %6 = vector.shape_cast %5 : vector<8xf32> to vector<8x1xf32>
    %cst_7 = arith.constant 3.125000e-02 : f32
    %7 = vector.broadcast %cst_7 : f32 to vector<8x1xf32>
    %8 = arith.mulf %6, %7 : vector<8x1xf32>
    %9 = vector.broadcast %8 : vector<8x1xf32> to vector<8x32xf32>
    %10 = arith.subf %4, %9 : vector<8x32xf32>
    %11 = arith.mulf %10, %10 : vector<8x32xf32>
    %cst_8 = arith.constant dense<0.000000e+00> : vector<8xf32>
    %12 = vector.multi_reduction <add>, %11, %cst_8 [1] : vector<8x32xf32> to vector<8xf32>
    %13 = vector.shape_cast %12 : vector<8xf32> to vector<8x1xf32>
    %cst_9 = arith.constant 3.125000e-02 : f32
    %14 = vector.broadcast %cst_9 : f32 to vector<8x1xf32>
    %15 = arith.mulf %13, %14 : vector<8x1xf32>
    %cst_10 = arith.constant 9.99999974E-6 : f32
    %16 = vector.broadcast %cst_10 : f32 to vector<8x1xf32>
    %17 = arith.addf %15, %16 : vector<8x1xf32>
    %18 = math.rsqrt %17 : vector<8x1xf32>
    %19 = vector.broadcast %18 : vector<8x1xf32> to vector<8x32xf32>
    %20 = arith.mulf %10, %19 : vector<8x32xf32>
    %21 = vector.broadcast %0 : vector<1x32xf32> to vector<8x32xf32>
    %22 = arith.mulf %20, %21 : vector<8x32xf32>
    %23 = vector.broadcast %1 : vector<1x32xf32> to vector<8x32xf32>
    %24 = arith.addf %22, %23 : vector<8x32xf32>
    %25 = arith.truncf %24 : vector<8x32xf32> to vector<8x32xbf16>
    %c0_11 = arith.constant 0 : index
    %c0_12 = arith.constant 0 : index
    %26 = vector.load %arg5[%c0_11, %c0_12] : memref<32x256xbf16, #tpu.memory_space<vmem>>, vector<32x256xbf16>
    %cst_13 = arith.constant dense<0.000000e+00> : vector<8x256xf32>
    %27 = tpu.matmul %25, %26, %cst_13 {dimension_numbers = #tpu.dot_dimension_numbers<[1], [0], [0], [1], [0, 0, 1, 1], [], []>} : vector<8x32xbf16>, vector<32x256xbf16>, vector<8x256xf32> -> vector<8x256xf32>
    %c0_14 = arith.constant 0 : index
    %c0_15 = arith.constant 0 : index
    %28 = vector.load %arg6[%c0_14, %c0_15] : memref<1x256xf32, #tpu.memory_space<vmem>>, vector<1x256xf32>
    %29 = vector.broadcast %28 : vector<1x256xf32> to vector<8x256xf32>
    %30 = arith.addf %27, %29 : vector<8x256xf32>
    %cst_16 = arith.constant 0.000000e+00 : f32
    %31 = vector.broadcast %cst_16 : f32 to vector<8x256xf32>
    %32 = arith.maximumf %30, %31 : vector<8x256xf32>
    %33 = arith.truncf %32 : vector<8x256xf32> to vector<8x256xbf16>
    %c0_17 = arith.constant 0 : index
    %c0_18 = arith.constant 0 : index
    %34 = vector.load %arg7[%c0_17, %c0_18] : memref<256x32xbf16, #tpu.memory_space<vmem>>, vector<256x32xbf16>
    %cst_19 = arith.constant dense<0.000000e+00> : vector<8x32xf32>
    %35 = tpu.matmul %33, %34, %cst_19 {dimension_numbers = #tpu.dot_dimension_numbers<[1], [0], [0], [1], [0, 0, 1, 1], [], []>} : vector<8x256xbf16>, vector<256x32xbf16>, vector<8x32xf32> -> vector<8x32xf32>
    %c0_20 = arith.constant 0 : index
    %c0_21 = arith.constant 0 : index
    %36 = vector.load %arg8[%c0_20, %c0_21] : memref<1x32xf32, #tpu.memory_space<vmem>>, vector<1x32xf32>
    %37 = vector.broadcast %36 : vector<1x32xf32> to vector<8x32xf32>
    %38 = arith.addf %35, %37 : vector<8x32xf32>
    %39 = arith.addf %38, %24 : vector<8x32xf32>
    %cst_22 = arith.constant dense<0.000000e+00> : vector<8xf32>
    %40 = vector.multi_reduction <add>, %39, %cst_22 [1] : vector<8x32xf32> to vector<8xf32>
    %41 = vector.shape_cast %40 : vector<8xf32> to vector<8x1xf32>
    %cst_23 = arith.constant 3.125000e-02 : f32
    %42 = vector.broadcast %cst_23 : f32 to vector<8x1xf32>
    %43 = arith.mulf %41, %42 : vector<8x1xf32>
    %44 = vector.broadcast %43 : vector<8x1xf32> to vector<8x32xf32>
    %45 = arith.subf %39, %44 : vector<8x32xf32>
    %46 = arith.mulf %45, %45 : vector<8x32xf32>
    %cst_24 = arith.constant dense<0.000000e+00> : vector<8xf32>
    %47 = vector.multi_reduction <add>, %46, %cst_24 [1] : vector<8x32xf32> to vector<8xf32>
    %48 = vector.shape_cast %47 : vector<8xf32> to vector<8x1xf32>
    %cst_25 = arith.constant 3.125000e-02 : f32
    %49 = vector.broadcast %cst_25 : f32 to vector<8x1xf32>
    %50 = arith.mulf %48, %49 : vector<8x1xf32>
    %cst_26 = arith.constant 9.99999974E-6 : f32
    %51 = vector.broadcast %cst_26 : f32 to vector<8x1xf32>
    %52 = arith.addf %50, %51 : vector<8x1xf32>
    %53 = math.rsqrt %52 : vector<8x1xf32>
    %54 = vector.broadcast %53 : vector<8x1xf32> to vector<8x32xf32>
    %55 = arith.mulf %45, %54 : vector<8x32xf32>
    %56 = vector.broadcast %0 : vector<1x32xf32> to vector<8x32xf32>
    %57 = arith.mulf %55, %56 : vector<8x32xf32>
    %58 = vector.broadcast %1 : vector<1x32xf32> to vector<8x32xf32>
    %59 = arith.addf %57, %58 : vector<8x32xf32>
    %c0_27 = arith.constant 0 : index
    %c0_28 = arith.constant 0 : index
    %60 = vector.load %arg9[%c0_27, %c0_28] : memref<8x32xf32, #tpu.memory_space<vmem>>, vector<8x32xf32>
    tpu.vector_store %arg9[%c0_27, %c0_28], %59 {strides = array<i32>} : memref<8x32xf32, #tpu.memory_space<vmem>>, vector<8x32xf32>,
    return
  }
  func.func @transform_0(%arg0: i32) -> (i32, i32) {
    %c0_i32 = arith.constant 0 : i32
    %c0_i32_0 = arith.constant 0 : i32
    return %arg0, %c0_i32 : i32, i32
  }
  func.func @transform_1(%arg0: i32) -> (i32, i32) {
    %c0_i32 = arith.constant 0 : i32
    %c0_i32_0 = arith.constant 0 : i32
    return %arg0, %c0_i32 : i32, i32
  }
  func.func @transform_2(%arg0: i32) -> (i32, i32) {
    %c0_i32 = arith.constant 0 : i32
    %c0_i32_0 = arith.constant 0 : i32
    %c0_i32_1 = arith.constant 0 : i32
    return %c0_i32, %c0_i32_0 : i32, i32
  }
  func.func @transform_3(%arg0: i32) -> (i32, i32) {
    %c0_i32 = arith.constant 0 : i32
    %c0_i32_0 = arith.constant 0 : i32
    %c0_i32_1 = arith.constant 0 : i32
    return %c0_i32, %c0_i32_0 : i32, i32
  }
  func.func @transform_4(%arg0: i32) -> (i32, i32) {
    %c0_i32 = arith.constant 0 : i32
    %c0_i32_0 = arith.constant 0 : i32
    %c0_i32_1 = arith.constant 0 : i32
    return %c0_i32, %c0_i32_0 : i32, i32
  }
  func.func @transform_5(%arg0: i32) -> (i32, i32) {
    %c0_i32 = arith.constant 0 : i32
    %c0_i32_0 = arith.constant 0 : i32
    %c0_i32_1 = arith.constant 0 : i32
    return %c0_i32, %c0_i32_0 : i32, i32
  }
  func.func @transform_6(%arg0: i32) -> (i32, i32) {
    %c0_i32 = arith.constant 0 : i32
    %c0_i32_0 = arith.constant 0 : i32
    %c0_i32_1 = arith.constant 0 : i32
    return %c0_i32, %c0_i32_0 : i32, i32
  }
  func.func @transform_7(%arg0: i32) -> (i32, i32) {
    %c0_i32 = arith.constant 0 : i32
    %c0_i32_0 = arith.constant 0 : i32
    %c0_i32_1 = arith.constant 0 : i32
    return %c0_i32, %c0_i32_0 : i32, i32
  }
  func.func @transform_8(%arg0: i32) -> (i32, i32) {
    %c0_i32 = arith.constant 0 : i32
    %c0_i32_0 = arith.constant 0 : i32
    return %arg0, %c0_i32 : i32, i32
  }
}

</mosaic_0001>

<llo_original>
// kernel: tpu_custom_call.1
$region0: #{tpu_custom_call.1}
  #allocation0 [shape = 'u32[]', space=smem, size = 0x4, offset = 0x4, fixed_abs, tag = 'smem constant byte address 0x4 - core index']
  #allocation1 [shape = 'u32[144,128]{1,0:T(1,128)}', space=vmem, size = 0x12000, scoped, tag = 'internal scratch']
  %s0 = inlined_call_operand.vmem [shape: f32[16,32], index: 0, kind: input, shape index: {}]
  %s1 = inlined_call_operand.vmem [shape: f32[16,32], index: 1, kind: input, shape index: {}]
  %s2 = inlined_call_operand.vmem [shape: f32[1,32], index: 2, kind: input, shape index: {}]
  %s3 = inlined_call_operand.vmem [shape: f32[1,32], index: 3, kind: input, shape index: {}]
  %s4 = inlined_call_operand.vmem [shape: bf16[32,256], index: 4, kind: input, shape index: {}]
  %s5 = inlined_call_operand.vmem [shape: f32[1,256], index: 5, kind: input, shape index: {}]
  %s6 = inlined_call_operand.vmem [shape: bf16[256,32], index: 6, kind: input, shape index: {}]
  %s7 = inlined_call_operand.vmem [shape: f32[1,32], index: 7, kind: input, shape index: {}]
  %s8 = inlined_call_operand.hbm [shape: f32[16,32], index: 8, kind: output, shape index: {}]
  %s9 = sld [smem:[#allocation0]]
  $region65: #{tpu_custom_call.1} parent=0
    _
  %s11 = ssub.s32 1, %s9
  %s12 = scalar_select 0, %s11, %s9
  $region1: #{tpu_custom_call.1} parent=0
    #allocation2 [shape = 'u8[8192]{0}', space=vmem, size = 0x2000, scoped, tag = 'output window, operand 0']
    #allocation3 [shape = 's32[2]{0}', space=sflag, size = 0x8, scoped, tag = 'scoped memory for tpu_custom_call.1']
    %13 = vsyncpa [#allocation3], 0
    %s14 = scalar_lea.sflag [#allocation3], 1
    %15 = vsyncpa %s14, 0
    loop: start=0, step=1, limit=4
    $region2: #{tpu_custom_call.1} parent=1 // loop_pre_header
      _
    $region3: #{tpu_custom_call.1} parent=1 // loop_header
      %s17 = sphi 0, %s21
      %p18 = scmp.ge.s32.totalorder %s17, 4
      %s27 = sphi 0, %s29
      %s30 = sphi 0, %s27
      %s31 = sphi 0, %s30
      %s47 = sphi 0, %s31
      %s53 = sphi 0, %s55
      %s56 = sphi 0, %s53
      %s57 = sphi 0, %s56
      %s73 = sphi 0, %s57
      %s77 = sphi 0, %s77
      %s79 = sphi 0, %s77
      %s80 = sphi 0, %s79
      %s94 = sphi 0, %s80
      %s98 = sphi 0, %s98
      %s100 = sphi 0, %s98
      %s101 = sphi 0, %s100
      %s115 = sphi 0, %s101
      %s119 = sphi 0, %s119
      %s121 = sphi 0, %s119
      %s122 = sphi 0, %s121
      %s136 = sphi 0, %s122
      %s140 = sphi 0, %s140
      %s142 = sphi 0, %s140
      %s143 = sphi 0, %s142
      %s157 = sphi 0, %s143
      %s161 = sphi 0, %s161
      %s163 = sphi 0, %s161
      %s164 = sphi 0, %s163
      %s178 = sphi 0, %s164
      %s182 = sphi 0, %s182
      %s184 = sphi 0, %s182
      %s185 = sphi 0, %s184
      %s199 = sphi 0, %s185
      %s205 = sphi 0, %s207
      %s208 = sphi 0, %s205
      %s209 = sphi 0, %s208
      %s225 = sphi 0, %s209
    $region4: #{tpu_custom_call.1} parent=1 // loop_header_branch
      %20 = sbr.rel (%p18) target = $region8
    $region5: #{tpu_custom_call.1} parent=1 // loop_body
      %s22 = ssub.s32 %s17, 1
      %s23 = ssub.s32 %s17, 2
      %s24 = sadd.s32 %s17, 1
      %s25 = ssub.s32 %s17, %s24
      %p26 = scmp.eq.s32.totalorder %s25, 0
      %s28 = sadd.s32 %s27, 1
      %s29 = scalar_select %p26, %s27, %s28
      %p32 = pneg %p26
      %p33 = scmp.eq.s32.totalorder %s17, 1
      %p34 = por %p32, %p33
      %p35 = scmp.ne.s32.totalorder %s27, %s30
      %p36 = scmp.eq.s32.totalorder %s17, 0
      %p37 = por %p35, %p36
      %p38 = scmp.ne.s32.totalorder %s27, %s30
      %p39 = scmp.eq.s32.totalorder %s22, 1
      %p40 = por %p38, %p39
      %p41 = scmp.ne.s32.totalorder %s30, %s31
      %p42 = scmp.eq.s32.totalorder %s22, 0
      %p43 = por %p41, %p42
      %p44 = scmp.ne.s32.totalorder %s30, %s31
      %p45 = scmp.eq.s32.totalorder %s23, 1
      %p46 = por %p44, %p45
      %p48 = scmp.ne.s32.totalorder %s31, %s47
      %p49 = scmp.eq.s32.totalorder %s23, 0
      %p50 = por %p48, %p49
      %s51 = ssub.s32 %s17, %s24
      %p52 = scmp.eq.s32.totalorder %s51, 0
      %s54 = sadd.s32 %s53, 1
      %s55 = scalar_select %p52, %s53, %s54
      %p58 = pneg %p52
      %p59 = scmp.eq.s32.totalorder %s17, 1
      %p60 = por %p58, %p59
      %p61 = scmp.ne.s32.totalorder %s53, %s56
      %p62 = scmp.eq.s32.totalorder %s17, 0
      %p63 = por %p61, %p62
      %p64 = scmp.ne.s32.totalorder %s53, %s56
      %p65 = scmp.eq.s32.totalorder %s22, 1
      %p66 = por %p64, %p65
      %p67 = scmp.ne.s32.totalorder %s56, %s57
      %p68 = scmp.eq.s32.totalorder %s22, 0
      %p69 = por %p67, %p68
      %p70 = scmp.ne.s32.totalorder %s56, %s57
      %p71 = scmp.eq.s32.totalorder %s23, 1
      %p72 = por %p70, %p71
      %p74 = scmp.ne.s32.totalorder %s57, %s73
      %p75 = scmp.eq.s32.totalorder %s23, 0
      %p76 = por %p74, %p75
      %s78 = sadd.s32 %s77, 1
      %p81 = scmp.eq.s32.totalorder %s17, 1
      %p82 = scmp.ne.s32.totalorder %s77, %s79
      %p83 = scmp.eq.s32.totalorder %s17, 0
      %p84 = por %p82, %p83
      %p85 = scmp.ne.s32.totalorder %s77, %s79
      %p86 = scmp.eq.s32.totalorder %s22, 1
      %p87 = por %p85, %p86
      %p88 = scmp.ne.s32.totalorder %s79, %s80
      %p89 = scmp.eq.s32.totalorder %s22, 0
      %p90 = por %p88, %p89
      %p91 = scmp.ne.s32.totalorder %s79, %s80
      %p92 = scmp.eq.s32.totalorder %s23, 1
      %p93 = por %p91, %p92
      %p95 = scmp.ne.s32.totalorder %s80, %s94
      %p96 = scmp.eq.s32.totalorder %s23, 0
      %p97 = por %p95, %p96
      %s99 = sadd.s32 %s98, 1
      %p102 = scmp.eq.s32.totalorder %s17, 1
      %p103 = scmp.ne.s32.totalorder %s98, %s100
      %p104 = scmp.eq.s32.totalorder %s17, 0
      %p105 = por %p103, %p104
      %p106 = scmp.ne.s32.totalorder %s98, %s100
      %p107 = scmp.eq.s32.totalorder %s22, 1
      %p108 = por %p106, %p107
      %p109 = scmp.ne.s32.totalorder %s100, %s101
      %p110 = scmp.eq.s32.totalorder %s22, 0
      %p111 = por %p109, %p110
      %p112 = scmp.ne.s32.totalorder %s100, %s101
      %p113 = scmp.eq.s32.totalorder %s23, 1
      %p114 = por %p112, %p113
      %p116 = scmp.ne.s32.totalorder %s101, %s115
      %p117 = scmp.eq.s32.totalorder %s23, 0
      %p118 = por %p116, %p117
      %s120 = sadd.s32 %s119, 1
      %p123 = scmp.eq.s32.totalorder %s17, 1
      %p124 = scmp.ne.s32.totalorder %s119, %s121
      %p125 = scmp.eq.s32.totalorder %s17, 0
      %p126 = por %p124, %p125
      %p127 = scmp.ne.s32.totalorder %s119, %s121
      %p128 = scmp.eq.s32.totalorder %s22, 1
      %p129 = por %p127, %p128
      %p130 = scmp.ne.s32.totalorder %s121, %s122
      %p131 = scmp.eq.s32.totalorder %s22, 0
      %p132 = por %p130, %p131
      %p133 = scmp.ne.s32.totalorder %s121, %s122
      %p134 = scmp.eq.s32.totalorder %s23, 1
      %p135 = por %p133, %p134
      %p137 = scmp.ne.s32.totalorder %s122, %s136
      %p138 = scmp.eq.s32.totalorder %s23, 0
      %p139 = por %p137, %p138
      %s141 = sadd.s32 %s140, 1
      %p144 = scmp.eq.s32.totalorder %s17, 1
      %p145 = scmp.ne.s32.totalorder %s140, %s142
      %p146 = scmp.eq.s32.totalorder %s17, 0
      %p147 = por %p145, %p146
      %p148 = scmp.ne.s32.totalorder %s140, %s142
      %p149 = scmp.eq.s32.totalorder %s22, 1
      %p150 = por %p148, %p149
      %p151 = scmp.ne.s32.totalorder %s142, %s143
      %p152 = scmp.eq.s32.totalorder %s22, 0
      %p153 = por %p151, %p152
      %p154 = scmp.ne.s32.totalorder %s142, %s143
      %p155 = scmp.eq.s32.totalorder %s23, 1
      %p156 = por %p154, %p155
      %p158 = scmp.ne.s32.totalorder %s143, %s157
      %p159 = scmp.eq.s32.totalorder %s23, 0
      %p160 = por %p158, %p159
      %s162 = sadd.s32 %s161, 1
      %p165 = scmp.eq.s32.totalorder %s17, 1
      %p166 = scmp.ne.s32.totalorder %s161, %s163
      %p167 = scmp.eq.s32.totalorder %s17, 0
      %p168 = por %p166, %p167
      %p169 = scmp.ne.s32.totalorder %s161, %s163
      %p170 = scmp.eq.s32.totalorder %s22, 1
      %p171 = por %p169, %p170
      %p172 = scmp.ne.s32.totalorder %s163, %s164
      %p173 = scmp.eq.s32.totalorder %s22, 0
      %p174 = por %p172, %p173
      %p175 = scmp.ne.s32.totalorder %s163, %s164
      %p176 = scmp.eq.s32.totalorder %s23, 1
      %p177 = por %p175, %p176
      %p179 = scmp.ne.s32.totalorder %s164, %s178
      %p180 = scmp.eq.s32.totalorder %s23, 0
      %p181 = por %p179, %p180
      %s183 = sadd.s32 %s182, 1
      %p186 = scmp.eq.s32.totalorder %s17, 1
      %p187 = scmp.ne.s32.totalorder %s182, %s184
      %p188 = scmp.eq.s32.totalorder %s17, 0
      %p189 = por %p187, %p188
      %p190 = scmp.ne.s32.totalorder %s182, %s184
      %p191 = scmp.eq.s32.totalorder %s22, 1
      %p192 = por %p190, %p191
      %p193 = scmp.ne.s32.totalorder %s184, %s185
      %p194 = scmp.eq.s32.totalorder %s22, 0
      %p195 = por %p193, %p194
      %p196 = scmp.ne.s32.totalorder %s184, %s185
      %p197 = scmp.eq.s32.totalorder %s23, 1
      %p198 = por %p196, %p197
      %p200 = scmp.ne.s32.totalorder %s185, %s199
      %p201 = scmp.eq.s32.totalorder %s23, 0
      %p202 = por %p200, %p201
      %s203 = ssub.s32 %s17, %s24
      %p204 = scmp.eq.s32.totalorder %s203, 0
      %s206 = sadd.s32 %s205, 1
      %s207 = scalar_select %p204, %s205, %s206
      %p210 = pneg %p204
      %p211 = scmp.eq.s32.totalorder %s17, 1
      %p212 = por %p210, %p211
      %p213 = scmp.ne.s32.totalorder %s205, %s208
      %p214 = scmp.eq.s32.totalorder %s17, 0
      %p215 = por %p213, %p214
      %p216 = scmp.ne.s32.totalorder %s205, %s208
      %p217 = scmp.eq.s32.totalorder %s22, 1
      %p218 = por %p216, %p217
      %p219 = scmp.ne.s32.totalorder %s208, %s209
      %p220 = scmp.eq.s32.totalorder %s22, 0
      %p221 = por %p219, %p220
      %p222 = scmp.ne.s32.totalorder %s208, %s209
      %p223 = scmp.eq.s32.totalorder %s23, 1
      %p224 = por %p222, %p223
      %p226 = scmp.ne.s32.totalorder %s209, %s225
      %p227 = scmp.eq.s32.totalorder %s23, 0
      %p228 = por %p226, %p227
      %p229 = scmp.le.s32.totalorder 1, %s17
      %p230 = scmp.lt.s32.totalorder %s17, 3
      %p231 = pnand %p229, %p230
      %p232 = pneg %p231
      // Predicated region
      $region9: #{tpu_custom_call.1} parent=5 // pred_check
        _
      $region10: #{tpu_custom_call.1} parent=5 // pred_check_branch
        %234 = sbr.rel (%p231) target = $region12
      $region11: #{tpu_custom_call.1} parent=5 // pred_region
        %s235 = ssub.s32 %s17, 1
        // Predicated region
        $region13: #{tpu_custom_call.1} parent=11 // pred_check
          %p236 = pneg %p90
        $region14: #{tpu_custom_call.1} parent=11 // pred_check_branch
          %238 = sbr.rel (%p236) target = $region16
        $region15: #{tpu_custom_call.1} parent=11 // pred_region
          _
        $region16: #{tpu_custom_call.1} parent=11 // pred_fallthru
          _
        // Predicated region
        $region17: #{tpu_custom_call.1} parent=11 // pred_check
          %p239 = pneg %p111
        $region18: #{tpu_custom_call.1} parent=11 // pred_check_branch
          %241 = sbr.rel (%p239) target = $region20
        $region19: #{tpu_custom_call.1} parent=11 // pred_region
          _
        $region20: #{tpu_custom_call.1} parent=11 // pred_fallthru
          _
        // Predicated region
        $region21: #{tpu_custom_call.1} parent=11 // pred_check
          %p242 = pneg %p132
        $region22: #{tpu_custom_call.1} parent=11 // pred_check_branch
          %244 = sbr.rel (%p242) target = $region24
        $region23: #{tpu_custom_call.1} parent=11 // pred_region
          _
        $region24: #{tpu_custom_call.1} parent=11 // pred_fallthru
          _
        // Predicated region
        $region25: #{tpu_custom_call.1} parent=11 // pred_check
          %p245 = pneg %p153
        $region26: #{tpu_custom_call.1} parent=11 // pred_check_branch
          %247 = sbr.rel (%p245) target = $region28
        $region27: #{tpu_custom_call.1} parent=11 // pred_region
          _
        $region28: #{tpu_custom_call.1} parent=11 // pred_fallthru
          _
        // Predicated region
        $region29: #{tpu_custom_call.1} parent=11 // pred_check
          %p248 = pneg %p174
        $region30: #{tpu_custom_call.1} parent=11 // pred_check_branch
          %250 = sbr.rel (%p248) target = $region32
        $region31: #{tpu_custom_call.1} parent=11 // pred_region
          _
        $region32: #{tpu_custom_call.1} parent=11 // pred_fallthru
          _
        // Predicated region
        $region33: #{tpu_custom_call.1} parent=11 // pred_check
          %p251 = pneg %p195
        $region34: #{tpu_custom_call.1} parent=11 // pred_check_branch
          %253 = sbr.rel (%p251) target = $region36
        $region35: #{tpu_custom_call.1} parent=11 // pred_region
          _
        $region36: #{tpu_custom_call.1} parent=11 // pred_fallthru
          _
      $region12: #{tpu_custom_call.1} parent=5 // pred_fallthru
        _
      %p254 = scmp.lt.s32.totalorder %s17, 2
      // Predicated region
      $region37: #{tpu_custom_call.1} parent=5 // pred_check
        %p255 = pneg %p254
      $region38: #{tpu_custom_call.1} parent=5 // pred_check_branch
        %257 = sbr.rel (%p255) target = $region40
      $region39: #{tpu_custom_call.1} parent=5 // pred_region
        // Predicated region
        $region41: #{tpu_custom_call.1} parent=39 // pred_check
          %p258 = pneg %p37
        $region42: #{tpu_custom_call.1} parent=39 // pred_check_branch
          %260 = sbr.rel (%p258) target = $region44
        $region43: #{tpu_custom_call.1} parent=39 // pred_region
          %p261 = scmp.lt.s32.totalorder %s17, 1
          %s262 = scalar_select %p261, %s17, 1
          %s263 = smul.addr %s262, 8
          %s264 = scalar_lea.vmem %s0, %s263
        $region44: #{tpu_custom_call.1} parent=39 // pred_fallthru
          _
        // Predicated region
        $region45: #{tpu_custom_call.1} parent=39 // pred_check
          %p265 = pneg %p63
        $region46: #{tpu_custom_call.1} parent=39 // pred_check_branch
          %267 = sbr.rel (%p265) target = $region48
        $region47: #{tpu_custom_call.1} parent=39 // pred_region
          %p268 = scmp.lt.s32.totalorder %s17, 1
          %s269 = scalar_select %p268, %s17, 1
          %s270 = smul.addr %s269, 8
          %s271 = scalar_lea.vmem %s1, %s270
        $region48: #{tpu_custom_call.1} parent=39 // pred_fallthru
          _
      $region40: #{tpu_custom_call.1} parent=5 // pred_fallthru
        _
      %p272 = scmp.le.s32.totalorder 1, %s17
      %p273 = scmp.lt.s32.totalorder %s17, 3
      %p274 = pnand %p272, %p273
      %p275 = pneg %p274
      // Predicated region
      $region49: #{tpu_custom_call.1} parent=5 // pred_check
        _
      $region50: #{tpu_custom_call.1} parent=5 // pred_check_branch
        %277 = sbr.rel (%p274) target = $region52
      $region51: #{tpu_custom_call.1} parent=5 // pred_region
        %s278 = ssub.s32 %s17, 1
        %p279 = scmp.lt.s32.totalorder %s22, 1
        %s280 = scalar_select %p279, %s22, 1
        %s281 = smul.addr %s280, 8
        %s282 = scalar_lea.vmem %s0, %s281
        %p283 = pneg %p43
        %p284 = pneg %p40
        %p285 = scmp.lt.s32.totalorder %s22, 1
        %s286 = scalar_select %p285, %s22, 1
        %s287 = smul.addr %s286, 8
        %s288 = scalar_lea.vmem %s1, %s287
        %p289 = pneg %p69
        %p290 = pneg %p66
        %p291 = pneg %p90
        %p292 = pneg %p87
        %p293 = pneg %p111
        %p294 = pneg %p108
        %p295 = pneg %p132
        %p296 = pneg %p129
        %p297 = pneg %p153
        %p298 = pneg %p150
        %p299 = pneg %p174
        %p300 = pneg %p171
        %p301 = pneg %p195
        %p302 = pneg %p192
        %p303 = pneg %p221
        %p304 = pneg %p218
        %s305 = sand.u32 %s208, 1
        %s306 = scalar_lea.sflag [#allocation3], %s305
        %s307 = sand.u32 %s208, 1
        %s308 = smul.addr %s307, 8
        %s309 = scalar_lea.vmem [#allocation2], %s308
        %p310 = scmp.lt.s32.totalorder %s22, 1
        %s311 = scalar_select %p310, %s22, 1
        %s312 = smul.addr %s311, 8
        %s313 = scalar_lea.vmem %s0, %s312
        %p314 = scmp.lt.s32.totalorder %s22, 1
        %s315 = scalar_select %p314, %s22, 1
        %s316 = smul.addr %s315, 8
        %s317 = scalar_lea.vmem %s1, %s316
        %v319 = vld [vmem:[%s2] sm:$0x1]
        %v320 = vld [vmem:[%s3] sm:$0x1]
        %v321 = vld [vmem:[%s313] sm:$0xff]
        %v322 = vld [vmem:[%s317] sm:$0xff]
        %v323 = vadd.f32 %v321, %v322
        %vm324 = vcmask 261120
        %v325 = vsel %vm324, %v323, 0.0
        %326 = vadd.xlane.f32.xlu0 %v325
        %v327 = vpop.xlane.xlu0 %326
        %v328 = vmul.f32 %v327, 0.03125
        %v329 = vsub.f32 %v323, %v328
        %v330 = vmul.f32 %v329, %v329
        %v331 = vsel %vm324, %v330, 0.0
        %332 = vadd.xlane.f32.xlu0 %v331
        %v333 = vpop.xlane.xlu0 %332
        %v334 = vmul.f32 %v333, 0.03125
        %v335 = vadd.f32 %v334, 1e-05
        %v336 = vrsqrt.pop %v335
        %v337 = vmul.f32 %v329, %v336
        %v339 = vlaneseq
        %v340 = vshrl.u32 %v339, 7
        %v341 = vsub.s32 0, %v340
        %v342 = vrot.slane %v319, %v341
        %v344 = vmul.f32 %v337, %v342
        %v346 = vlaneseq
        %v347 = vshrl.u32 %v346, 7
        %v348 = vsub.s32 0, %v347
        %v349 = vrot.slane %v320, %v348
        %v351 = vadd.f32 %v344, %v349
        %v352 = vpack.c.bf16 %v351, %v351
        %v353 = vld [vmem:[%s4] sm:$0xff]
        %v354 = vld [vmem:[%s4 + $0x8] sm:$0xff]
        %v355 = vld [vmem:[%s4 + $0x10] sm:$0xff]
        %v356 = vld [vmem:[%s4 + $0x18] sm:$0xff]
        %v357 = vld [vmem:[%s5] sm:$0x3]
        %v359 = vlaneseq
        %v360 = vshrl.u32 %v359, 7
        %v361 = vsub.s32 0, %v360
        %v362 = vrot.slane %v357, %v361
        %v363 = vlaneseq
        %v364 = vshrl.u32 %v363, 7
        %v365 = vsub.s32 1, %v364
        %v366 = vrot.slane %v357, %v365
        %v373 = vunpack.c.l.b16 %v353
        %v374 = vunpack.c.h.b16 %v353
        %v375 = vunpack.c.l.b16 %v354
        %v376 = vunpack.c.h.b16 %v354
        %v377 = vunpack.c.l.b16 %v355
        %v378 = vunpack.c.h.b16 %v355
        %v379 = vunpack.c.l.b16 %v356
        %v380 = vunpack.c.h.b16 %v356
        %v381 = vpack.c.b16 %v375, %v373
        %v382 = vpack.c.b16 %v376, %v374
        %v383 = vpack.c.b16 %v379, %v377
        %v384 = vpack.c.b16 %v380, %v378
        %v390 = vsel %vm324, %v352, 0
        %392 = vmatprep.subr.bf16.mxu0 0
        %393 = vmatpush1.bf16.msra.mxu0 0
        %394 = vmatprep.subr.bf16.mxu0 0
        %395 = vmatpush1.bf16.msra.mxu0 0
        %396 = vmatprep.subr.bf16.mxu0 0
        %397 = vmatpush1.bf16.msra.mxu0 0
        %398 = vmatprep.subr.bf16.mxu0 0
        %399 = vmatpush1.bf16.msra.mxu0 0
        %400 = vmatprep.subr.bf16.mxu0 0
        %401 = vmatpush1.bf16.msra.mxu0 0
        %402 = vmatprep.subr.bf16.mxu0 0
        %403 = vmatpush1.bf16.msra.mxu0 0
        %404 = vmatprep.subr.bf16.mxu0 %v384
        %405 = vmatpush1.bf16.msra.mxu0 %v383
        %406 = vmatprep.subr.bf16.mxu0 %v382
        %407 = vmatpush1.bf16.msra.mxu0 %v381
        %408 = vmatprep.subr.bf16.mxu0 0
        %409 = vmatpush2.bf16.msra.mxu0 0
        %410 = vmatprep.subr.bf16.mxu0 0
        %411 = vmatpush2.bf16.msra.mxu0 0
        %412 = vmatprep.subr.bf16.mxu0 0
        %413 = vmatpush2.bf16.msra.mxu0 0
        %414 = vmatprep.subr.bf16.mxu0 0
        %415 = vmatpush2.bf16.msra.mxu0 0
        %416 = vmatprep.subr.bf16.mxu0 0
        %417 = vmatpush2.bf16.msra.mxu0 0
        %418 = vmatprep.subr.bf16.mxu0 0
        %419 = vmatpush2.bf16.msra.mxu0 0
        %420 = vmatprep.subr.bf16.mxu0 0
        %421 = vmatpush2.bf16.msra.mxu0 0
        %422 = vmatprep.subr.bf16.mxu0 0
        %423 = vmatpush2.bf16.msra.mxu0 0
        %424 = vmatprep.mubr.bf16.mxu0 0
        %425 = vmatmul.mubr.bf16.gmra.mxu0 %v390
        %v426 = vpop.f32.mrf.mxu0
        %v427 = vadd.f32 %v362, %v426
        %v428 = vpop.f32.mrf.mxu0
        %v429 = vadd.f32 %v366, %v428
        %v430 = vpop.f32.mrf.mxu0
        %v431 = vpop.f32.mrf.mxu0
        %432 = vdwg.mxu0
        %v433 = vmax.f32 %v427, 0.0
        %v434 = vmax.f32 %v429, 0.0
        %v435 = vpack.c.bf16 %v433, %v433
        %v436 = vpack.c.bf16 %v434, %v434
        %v437 = vld [vmem:[%s6] sm:$0xf]
        %v438 = vld [vmem:[%s6 + $0x4] sm:$0xf]
        %v439 = vld [vmem:[%s6 + $0x8] sm:$0xf]
        %v440 = vld [vmem:[%s6 + $0xc] sm:$0xf]
        %v441 = vld [vmem:[%s6 + $0x10] sm:$0xf]
        %v442 = vld [vmem:[%s6 + $0x14] sm:$0xf]
        %v443 = vld [vmem:[%s6 + $0x18] sm:$0xf]
        %v444 = vld [vmem:[%s6 + $0x1c] sm:$0xf]
        %v445 = vld [vmem:[%s6 + $0x20] sm:$0xf]
        %v446 = vld [vmem:[%s6 + $0x24] sm:$0xf]
        %v447 = vld [vmem:[%s6 + $0x28] sm:$0xf]
        %v448 = vld [vmem:[%s6 + $0x2c] sm:$0xf]
        %v449 = vld [vmem:[%s6 + $0x30] sm:$0xf]
        %v450 = vld [vmem:[%s6 + $0x34] sm:$0xf]
        %v451 = vld [vmem:[%s6 + $0x38] sm:$0xf]
        %v452 = vld [vmem:[%s6 + $0x3c] sm:$0xf]
        %v453 = vld [vmem:[%s6 + $0x40] sm:$0xf]
        %v454 = vld [vmem:[%s6 + $0x44] sm:$0xf]
        %v455 = vld [vmem:[%s6 + $0x48] sm:$0xf]
        %v456 = vld [vmem:[%s6 + $0x4c] sm:$0xf]
        %v457 = vld [vmem:[%s6 + $0x50] sm:$0xf]
        %v458 = vld [vmem:[%s6 + $0x54] sm:$0xf]
        %v459 = vld [vmem:[%s6 + $0x58] sm:$0xf]
        %v460 = vld [vmem:[%s6 + $0x5c] sm:$0xf]
        %v461 = vld [vmem:[%s6 + $0x60] sm:$0xf]
        %v462 = vld [vmem:[%s6 + $0x64] sm:$0xf]
        %v463 = vld [vmem:[%s6 + $0x68] sm:$0xf]
        %v464 = vld [vmem:[%s6 + $0x6c] sm:$0xf]
        %v465 = vld [vmem:[%s6 + $0x70] sm:$0xf]
        %v466 = vld [vmem:[%s6 + $0x74] sm:$0xf]
        %v467 = vld [vmem:[%s6 + $0x78] sm:$0xf]
        %v468 = vld [vmem:[%s6 + $0x7c] sm:$0xf]
        %v469 = vld [vmem:[%s7] sm:$0x1]
        %v471 = vlaneseq
        %v472 = vshrl.u32 %v471, 7
        %v473 = vsub.s32 0, %v472
        %v474 = vrot.slane %v469, %v473
        %v508 = vunpack.c.l.b16 %v437
        %v509 = vunpack.c.l.b16 %v438
        %v510 = vunpack.c.l.b16 %v439
        %v511 = vunpack.c.l.b16 %v440
        %v512 = vunpack.c.l.b16 %v441
        %v513 = vunpack.c.l.b16 %v442
        %v514 = vunpack.c.l.b16 %v443
        %v515 = vunpack.c.l.b16 %v444
        %v516 = vunpack.c.l.b16 %v445
        %v517 = vunpack.c.l.b16 %v446
        %v518 = vunpack.c.l.b16 %v447
        %v519 = vunpack.c.l.b16 %v448
        %v520 = vunpack.c.l.b16 %v449
        %v521 = vunpack.c.l.b16 %v450
        %v522 = vunpack.c.l.b16 %v451
        %v523 = vunpack.c.l.b16 %v452
        %v524 = vunpack.c.l.b16 %v453
        %v525 = vunpack.c.l.b16 %v454
        %v526 = vunpack.c.l.b16 %v455
        %v527 = vunpack.c.l.b16 %v456
        %v528 = vunpack.c.l.b16 %v457
        %v529 = vunpack.c.l.b16 %v458
        %v530 = vunpack.c.l.b16 %v459
        %v531 = vunpack.c.l.b16 %v460
        %v532 = vunpack.c.l.b16 %v461
        %v533 = vunpack.c.l.b16 %v462
        %v534 = vunpack.c.l.b16 %v463
        %v535 = vunpack.c.l.b16 %v464
        %v536 = vunpack.c.l.b16 %v465
        %v537 = vunpack.c.l.b16 %v466
        %v538 = vunpack.c.l.b16 %v467
        %v539 = vunpack.c.l.b16 %v468
        %v540 = vpack.c.b16 %v509, %v508
        %v541 = vpack.c.b16 %v511, %v510
        %v542 = vpack.c.b16 %v513, %v512
        %v543 = vpack.c.b16 %v515, %v514
        %v544 = vpack.c.b16 %v517, %v516
        %v545 = vpack.c.b16 %v519, %v518
        %v546 = vpack.c.b16 %v521, %v520
        %v547 = vpack.c.b16 %v523, %v522
        %v548 = vpack.c.b16 %v525, %v524
        %v549 = vpack.c.b16 %v527, %v526
        %v550 = vpack.c.b16 %v529, %v528
        %v551 = vpack.c.b16 %v531, %v530
        %v552 = vpack.c.b16 %v533, %v532
        %v553 = vpack.c.b16 %v535, %v534
        %v554 = vpack.c.b16 %v537, %v536
        %v555 = vpack.c.b16 %v539, %v538
        %572 = vmatprep.subr.bf16.mxu0 0
        %573 = vmatpush1.bf16.msra.mxu0 %v547
        %574 = vmatprep.subr.bf16.mxu0 0
        %575 = vmatpush1.bf16.msra.mxu0 %v546
        %576 = vmatprep.subr.bf16.mxu0 0
        %577 = vmatpush1.bf16.msra.mxu0 %v545
        %578 = vmatprep.subr.bf16.mxu0 0
        %579 = vmatpush1.bf16.msra.mxu0 %v544
        %580 = vmatprep.subr.bf16.mxu0 0
        %581 = vmatpush1.bf16.msra.mxu0 %v543
        %582 = vmatprep.subr.bf16.mxu0 0
        %583 = vmatpush1.bf16.msra.mxu0 %v542
        %584 = vmatprep.subr.bf16.mxu0 0
        %585 = vmatpush1.bf16.msra.mxu0 %v541
        %586 = vmatprep.subr.bf16.mxu0 0
        %587 = vmatpush1.bf16.msra.mxu0 %v540
        %588 = vmatprep.subr.bf16.mxu0 0
        %589 = vmatpush2.bf16.msra.mxu0 %v555
        %590 = vmatprep.subr.bf16.mxu0 0
        %591 = vmatpush2.bf16.msra.mxu0 %v554
        %592 = vmatprep.subr.bf16.mxu0 0
        %593 = vmatpush2.bf16.msra.mxu0 %v553
        %594 = vmatprep.subr.bf16.mxu0 0
        %595 = vmatpush2.bf16.msra.mxu0 %v552
        %596 = vmatprep.subr.bf16.mxu0 0
        %597 = vmatpush2.bf16.msra.mxu0 %v551
        %598 = vmatprep.subr.bf16.mxu0 0
        %599 = vmatpush2.bf16.msra.mxu0 %v550
        %600 = vmatprep.subr.bf16.mxu0 0
        %601 = vmatpush2.bf16.msra.mxu0 %v549
        %602 = vmatprep.subr.bf16.mxu0 0
        %603 = vmatpush2.bf16.msra.mxu0 %v548
        %604 = vmatprep.mubr.bf16.mxu0 %v436
        %605 = vmatmul.mubr.bf16.gmra.mxu0 %v435
        %v606 = vpop.f32.mrf.mxu0
        %v607 = vadd.f32 %v474, %v606
        %v608 = vpop.f32.mrf.mxu0
        %v609 = vpop.f32.mrf.mxu0
        %v610 = vpop.f32.mrf.mxu0
        %611 = vdwg.mxu0
        %v612 = vadd.f32 %v607, %v351
        %v613 = vsel %vm324, %v612, 0.0
        %614 = vadd.xlane.f32.xlu0 %v613
        %v615 = vpop.xlane.xlu0 %614
        %v616 = vmul.f32 %v615, 0.03125
        %v617 = vsub.f32 %v612, %v616
        %v618 = vmul.f32 %v617, %v617
        %v619 = vsel %vm324, %v618, 0.0
        %620 = vadd.xlane.f32.xlu0 %v619
        %v621 = vpop.xlane.xlu0 %620
        %v622 = vmul.f32 %v621, 0.03125
        %v623 = vadd.f32 %v622, 1e-05
        %v624 = vrsqrt.pop %v623
        %v625 = vmul.f32 %v617, %v624
        %v626 = vmul.f32 %v625, %v342
        %v627 = vadd.f32 %v626, %v349
        %628 = vst.msk [vmem:[%s309] sm:$0xff] %vm324, %v627
        %s629 = sand.u32 %s208, 1
        %s630 = scalar_lea.sflag [#allocation3], %s629
        %s631 = sand.u32 %s208, 1
        %s632 = smul.addr %s631, 8
        %s633 = scalar_lea.vmem [#allocation2], %s632
        // Predicated region
        $region53: #{tpu_custom_call.1} parent=51 // pred_check
          %p634 = pneg %p218
        $region54: #{tpu_custom_call.1} parent=51 // pred_check_branch
          %636 = sbr.rel (%p634) target = $region56
        $region55: #{tpu_custom_call.1} parent=51 // pred_region
          %s638 = ssub.s32 128, 128
          %639 = vsyncadd %s630, %s638
          %s640 = smul.addr %s22, 128
          %s641 = scalar_lea.hbm %s8, %s640
          %s643 = sshll.u32 %s633, 4
          %s644 = int_to_ptr.vmem [resolvable:$true] %s643
          %646 = dma.vmem_to_hbm [thread:$0]  %s644, 128, %s641, %s630
        $region56: #{tpu_custom_call.1} parent=51 // pred_fallthru
          _
      $region52: #{tpu_custom_call.1} parent=5 // pred_fallthru
        _
      %p647 = scmp.le.s32.totalorder 2, %s17
      // Predicated region
      $region57: #{tpu_custom_call.1} parent=5 // pred_check
        %p648 = pneg %p647
      $region58: #{tpu_custom_call.1} parent=5 // pred_check_branch
        %650 = sbr.rel (%p648) target = $region60
      $region59: #{tpu_custom_call.1} parent=5 // pred_region
        %s651 = ssub.s32 %s17, 2
        // Predicated region
        $region61: #{tpu_custom_call.1} parent=59 // pred_check
          %p652 = pneg %p224
        $region62: #{tpu_custom_call.1} parent=59 // pred_check_branch
          %654 = sbr.rel (%p652) target = $region64
        $region63: #{tpu_custom_call.1} parent=59 // pred_region
          %s655 = sand.u32 %s209, 1
          %s656 = scalar_lea.sflag [#allocation3], %s655
          %s657 = sand.u32 %s209, 1
          %s658 = smul.addr %s657, 8
          %s659 = scalar_lea.vmem [#allocation2], %s658
          %660 = dma.done %s656, 128
        $region64: #{tpu_custom_call.1} parent=59 // pred_fallthru
          _
      $region60: #{tpu_custom_call.1} parent=5 // pred_fallthru
        _
    $region6: #{tpu_custom_call.1} parent=1 // loop_footer
      %s21 = sadd.s32 1, %s17
    $region7: #{tpu_custom_call.1} parent=1 // loop_footer_branch
      %16 = sbr.rel target = $region3
    $region8: #{tpu_custom_call.1} parent=1 // loop_exit
      _
    %661 = vsyncpa [#allocation3], 1
    %s662 = scalar_lea.sflag [#allocation3], 1
    %663 = vsyncpa %s662, 1

</llo_original>
